<compile_context>
chip_gen: v7x
topology: tpu7x:2x2x1
jax: 0.10.0
libtpu: 0.0.40
codegen_flags: <defaults>
</compile_context>

<pallas_src>
import numpy as np
import jax
import jax.numpy as jnp
from jax.experimental import pallas as pl
from jax.experimental.pallas import tpu as pltpu


# ----------------------------- TTA transforms -----------------------------

# Names only; augment+deaugment is folded into tap-permuted conv weights below.
TRANSFORMS = ("hflip", "vflip")


# --------------------------- patch construction (K, M) -----------------------------

def _build_patches_km(image_nchw, m_pad, dtype=jnp.bfloat16):
    """im2col patches of the original image, built directly in (K, M) = (9*Cin, N*H*W).

    The bf16 cast happens on the small channel-major image (not the 9x slab), and the
    taps are concatenated straight into the transposed layout the kernel consumes.
    """
    n, cin, h, w = image_nchw.shape
    m_rows = n * h * w
    x_c = jnp.transpose(image_nchw, (1, 0, 2, 3)).astype(dtype)        # (Cin, N, H, W)
    xp = jnp.pad(x_c, ((0, 0), (0, 0), (1, 1), (1, 1)))                # spatial zero-pad
    taps = [xp[:, :, kh:kh + h, kw:kw + w].reshape(cin, m_rows)
            for kh in range(3) for kw in range(3)]                     # tap-major K order
    patches = jnp.concatenate(taps, axis=0)                            # (9*Cin, M)
    if m_pad != m_rows:
        patches = jnp.pad(patches, ((0, 0), (0, m_pad - m_rows)))
    return patches


# ------------------------------- Pallas kernel ------------------------------------

def _make_tta_kernel(merge_mode, a_total, inv_n):
    """Conv-as-matmul over one pixel tile + ttach.Merger reduction, fully in-register.

    Refs (per grid step i):
      p_ref : (K, tm)           bf16 im2col patches of the ORIGINAL image (pixel tile i)
      w_ref : (A, Cout, K)      bf16 tap-permuted weight matrices (A==1 for mean/sum,
                                where weights/bias/scale are pre-combined in the wrapper)
      b_ref : (Cout, 1)         f32 bias (pre-scaled for mean/sum)
      o_ref : (Cout, tm)        f32 merged mask tile (lane-dense pixel axis)
    """
    def kernel(p_ref, w_ref, b_ref, o_ref):
        p = p_ref[...]
        b = b_ref[...]
        acc = None
        for a in range(a_total):            # static unroll; a_total is 1 or 3
            pred = jnp.dot(w_ref[a], p, preferred_element_type=jnp.float32) + b
            if merge_mode == "tsharpen":
                pred = jnp.sqrt(pred)
            if acc is None:
                acc = pred
            elif merge_mode in ("mean", "sum", "tsharpen"):
                acc = acc + pred
            elif merge_mode == "gmean":
                acc = acc * pred
            elif merge_mode == "max":
                acc = jnp.maximum(acc, pred)
            elif merge_mode == "min":
                acc = jnp.minimum(acc, pred)
        if merge_mode == "tsharpen":
            acc = acc * inv_n
        elif merge_mode == "gmean":
            acc = acc ** inv_n
        o_ref[...] = acc

    return kernel


# ---------------------------- wrapper forward (JAX) --------------------------------

def segmentation_tta_forward(image_nchw, conv_w, conv_b, merge_mode="mean", tm=None):
    """SegmentationTTAWrapper.forward for the synthetic 3x3-conv model.

    image_nchw : (N, Cin, H, W) float32
    conv_w     : (Cout, Cin, 3, 3) float32   (PyTorch OIHW)
    conv_b     : (Cout,) float32
    returns    : (N, Cout, H, W) float32 merged mask (NCHW, matching PyTorch)
    """
    n, cin, h, w = image_nchw.shape
    cout = conv_w.shape[0]
    k_dim = 9 * cin
    m_rows = n * h * w

    # Reference-wrapper quirk: Merger built with n=len(transforms) but fed T+1 predictions.
    inv_n = 1.0 / float(len(TRANSFORMS))

    # identity, hflip+deaug (kw-reversed), vflip+deaug (kh-reversed) — order matches
    # [identity] + TRANSFORMS in the reference wrapper.
    w_variants = [conv_w, conv_w[:, :, :, ::-1], conv_w[:, :, ::-1, :]]

    def to_mat(wv):  # OIHW -> (Cout, 9*Cin); row order matches im2col tap-major K layout
        return jnp.transpose(wv, (2, 3, 1, 0)).reshape(k_dim, cout).T

    if merge_mode in ("mean", "sum"):
        # Linear merge: fold the whole ensemble (weights, bias, merge scale) into one conv.
        scale = inv_n if merge_mode == "mean" else 1.0
        w_comb = (w_variants[0] + w_variants[1] + w_variants[2]) * scale
        w_stack = to_mat(w_comb)[None]                                  # (1, Cout, K)
        b_col = (conv_b * (len(w_variants) * scale)).reshape(cout, 1).astype(jnp.float32)
    else:
        w_stack = jnp.stack([to_mat(wv) for wv in w_variants], axis=0)  # (3, Cout, K)
        b_col = conv_b.reshape(cout, 1).astype(jnp.float32)
    a_total = int(w_stack.shape[0])

    # Pixel tile: lane-aligned and large (per-grid-step overhead dominates this kernel),
    # capped at 8192 so the (Cout, tm) f32 result stays vreg/VMEM friendly and big inputs
    # keep >= 2 tiles for megacore sharding.
    if tm is None:
        tm = min(8192, -(-m_rows // 128) * 128)
    m_pad = -(-m_rows // tm) * tm

    patches = _build_patches_km(image_nchw, m_pad, jnp.bfloat16)        # (K, m_pad) bf16

    grid = (m_pad // tm,)
    kernel = _make_tta_kernel(merge_mode, a_total, inv_n)

    cost = pl.CostEstimate(
        flops=2 * a_total * m_pad * k_dim * cout,
        transcendentals=0,
        bytes_accessed=k_dim * m_pad * 2 + a_total * cout * k_dim * 2 + cout * m_pad * 4,
    )

    out_t = pl.pallas_call(
        kernel,
        out_shape=jax.ShapeDtypeStruct((cout, m_pad), jnp.float32),
        grid_spec=pltpu.PrefetchScalarGridSpec(
            num_scalar_prefetch=0,
            grid=grid,
            in_specs=[
                # patches: one tile of the pixel axis per step
                pl.BlockSpec((k_dim, tm), lambda i: (0, i)),
                # all tap-permuted weights: constant index map -> DMA'd once, VMEM-resident
                pl.BlockSpec((a_total, cout, k_dim), lambda i: (0, 0, 0)),
                # bias: constant index map -> VMEM-resident
                pl.BlockSpec((cout, 1), lambda i: (0, 0)),
            ],
            out_specs=pl.BlockSpec((cout, tm), lambda i: (0, i)),
        ),
        compiler_params=pltpu.CompilerParams(
            dimension_semantics=("parallel",),
            vmem_limit_bytes=32 << 20,
        ),
        cost_estimate=cost,
    )(patches, w_stack.astype(jnp.bfloat16), b_col)

    out = out_t[:, :m_rows].reshape(cout, n, h, w)
    return jnp.transpose(out, (1, 0, 2, 3))                             # -> NCHW
    # TODO(synk): output_mask_key dict wrapping and dispatch of an arbitrary wrapped
    # nn.Module have no Pallas equivalent; the model here is the synthetic conv above.


# --------------------------- plain-JAX reference (check) ---------------------------

def _reference_forward(image_nchw, conv_w, conv_b, merge_mode="mean"):
    def model(img):
        y = jax.lax.conv_general_dilated(
            img, conv_w, window_strides=(1, 1), padding=((1, 1), (1, 1)),
            dimension_numbers=("NCHW", "OIHW", "NCHW"))
        return y + conv_b.reshape(1, -1, 1, 1)

    preds = [model(image_nchw)]
    for name in TRANSFORMS:
        flip = (lambda t: t[..., ::-1]) if name == "hflip" else (lambda t: t[..., ::-1, :])
        preds.append(flip(model(flip(image_nchw))))

    n_div = float(len(TRANSFORMS))
    if merge_mode in ("mean", "sum", "tsharpen"):
        ps = [jnp.sqrt(p) for p in preds] if merge_mode == "tsharpen" else preds
        s = ps[0]
        for p in ps[1:]:
            s = s + p
        if merge_mode in ("mean", "tsharpen"):
            s = s / n_div
        return s
    if merge_mode == "gmean":
        s = preds[0]
        for p in preds[1:]:
            s = s * p
        return s ** (1.0 / n_div)
    op = jnp.maximum if merge_mode == "max" else jnp.minimum
    s = preds[0]
    for p in preds[1:]:
        s = op(s, p)
    return s


# -------------------------------------- main ---------------------------------------

if __name__ == "__main__":
    key = jax.random.PRNGKey(0)
    kx, kw, kb = jax.random.split(key, 3)

    N, CIN, H, W, COUT = 2, 4, 16, 16, 3
    image = jax.random.normal(kx, (N, CIN, H, W), dtype=jnp.float32)
    conv_w = jax.random.normal(kw, (COUT, CIN, 3, 3), dtype=jnp.float32) * 0.1
    conv_b = jax.random.normal(kb, (COUT,), dtype=jnp.float32) * 0.01

    # Default 'mean' path (single fused conv, no augmentation axis).
    out = segmentation_tta_forward(image, conv_w, conv_b, merge_mode="mean")
    out = jax.block_until_ready(out)
    ref = _reference_forward(image, conv_w, conv_b, merge_mode="mean")
    np.testing.assert_allclose(np.asarray(out), np.asarray(ref), rtol=2e-2, atol=2e-2)

    # Non-linear merge path ('max') exercises the multi-weight kernel variant.
    out_max = segmentation_tta_forward(image, conv_w, conv_b, merge_mode="max")
    out_max = jax.block_until_ready(out_max)
    ref_max = _reference_forward(image, conv_w, conv_b, merge_mode="max")
    np.testing.assert_allclose(np.asarray(out_max), np.asarray(ref_max), rtol=2e-2, atol=2e-2)

    print("KERNEL_OK")
</pallas_src>

<mosaic_0001>
module attributes {stable_mosaic.version = 11 : i64} {
  func.func @kernel(%arg0: i32, %arg1: memref<36x512xbf16, #tpu.memory_space<vmem>>, %arg2: memref<1x3x36xbf16, #tpu.memory_space<vmem>>, %arg3: memref<3x1xf32, #tpu.memory_space<vmem>>, %arg4: memref<3x512xf32, #tpu.memory_space<vmem>>) attributes {dimension_semantics = [#tpu.dimension_semantics<parallel>], iteration_bounds = array<i64: 1>, scalar_prefetch = 0 : i64, scratch_operands = 0 : i64, tpu.core_type = #tpu.core_type<tc>, window_params = [{transform_indices = @transform_0, window_bounds = array<i64: 36, 512>}, {pipeline_mode = #tpu.pipeline_mode<synchronous>, transform_indices = @transform_1, window_bounds = array<i64: 1, 3, 36>}, {pipeline_mode = #tpu.pipeline_mode<synchronous>, transform_indices = @transform_2, window_bounds = array<i64: 3, 1>}, {transform_indices = @transform_3, window_bounds = array<i64: 3, 512>}]} {
    %c0 = arith.constant 0 : index
    %c0_0 = arith.constant 0 : index
    %0 = vector.load %arg1[%c0, %c0_0] : memref<36x512xbf16, #tpu.memory_space<vmem>>, vector<36x512xbf16>
    %c0_1 = arith.constant 0 : index
    %c0_2 = arith.constant 0 : index
    %1 = vector.load %arg3[%c0_1, %c0_2] : memref<3x1xf32, #tpu.memory_space<vmem>>, vector<3x1xf32>
    %c0_3 = arith.constant 0 : index
    %c0_4 = arith.constant 0 : index
    %c0_5 = arith.constant 0 : index
    %2 = vector.load %arg2[%c0_3, %c0_4, %c0_5] : memref<1x3x36xbf16, #tpu.memory_space<vmem>>, vector<1x3x36xbf16>
    %3 = vector.shape_cast %2 : vector<1x3x36xbf16> to vector<3x36xbf16>
    %cst = arith.constant dense<0.000000e+00> : vector<3x512xf32>
    %4 = tpu.matmul %3, %0, %cst {dimension_numbers = #tpu.dot_dimension_numbers<[1], [0], [0], [1], [0, 0, 1, 1], [], []>} : vector<3x36xbf16>, vector<36x512xbf16>, vector<3x512xf32> -> vector<3x512xf32>
    %5 = vector.broadcast %1 : vector<3x1xf32> to vector<3x512xf32>
    %6 = arith.addf %4, %5 : vector<3x512xf32>
    %c0_6 = arith.constant 0 : index
    %c0_7 = arith.constant 0 : index
    %7 = vector.load %arg4[%c0_6, %c0_7] : memref<3x512xf32, #tpu.memory_space<vmem>>, vector<3x512xf32>
    tpu.vector_store %arg4[%c0_6, %c0_7], %6 {strides = array<i32>} : memref<3x512xf32, #tpu.memory_space<vmem>>, vector<3x512xf32>,
    return
  }
  func.func @transform_0(%arg0: i32) -> (i32, i32) {
    %c0_i32 = arith.constant 0 : i32
    %c0_i32_0 = arith.constant 0 : i32
    return %c0_i32, %arg0 : i32, i32
  }
  func.func @transform_1(%arg0: i32) -> (i32, i32, i32) {
    %c0_i32 = arith.constant 0 : i32
    %c0_i32_0 = arith.constant 0 : i32
    %c0_i32_1 = arith.constant 0 : i32
    %c0_i32_2 = arith.constant 0 : i32
    return %c0_i32, %c0_i32_0, %c0_i32_1 : i32, i32, i32
  }
  func.func @transform_2(%arg0: i32) -> (i32, i32) {
    %c0_i32 = arith.constant 0 : i32
    %c0_i32_0 = arith.constant 0 : i32
    %c0_i32_1 = arith.constant 0 : i32
    return %c0_i32, %c0_i32_0 : i32, i32
  }
  func.func @transform_3(%arg0: i32) -> (i32, i32) {
    %c0_i32 = arith.constant 0 : i32
    %c0_i32_0 = arith.constant 0 : i32
    return %c0_i32, %arg0 : i32, i32
  }
}

</mosaic_0001>

<llo_original>
// kernel: tpu_custom_call.1
$region0: #{tpu_custom_call.1}
  #allocation0 [shape = 'u32[]', space=smem, size = 0x4, offset = 0x4, fixed_abs, tag = 'smem constant byte address 0x4 - core index']
  #allocation1 [shape = 'u32[144,128]{1,0:T(1,128)}', space=vmem, size = 0x12000, scoped, tag = 'internal scratch']
  %s0 = inlined_call_operand.hbm [shape: bf16[36,512], index: 0, kind: input, shape index: {}]
  %s1 = inlined_call_operand.vmem [shape: bf16[1,3,36], index: 1, kind: input, shape index: {}]
  %s2 = inlined_call_operand.vmem [shape: f32[3,1], index: 2, kind: input, shape index: {}]
  %s3 = inlined_call_operand.hbm [shape: f32[3,512], index: 3, kind: output, shape index: {}]
  %s4 = sld [smem:[#allocation0]]
  $region26: #{tpu_custom_call.1} parent=0
    _
  %s6 = ssub.s32 1, %s4
  %s7 = scalar_select 0, %s6, %s4
  $region1: #{tpu_custom_call.1} parent=0
    #allocation2 [shape = 'u8[40960]{0}', space=vmem, size = 0xa000, scoped, tag = 'input window, operand 0, single buffered']
    #allocation3 [shape = 's32[1]{0}', space=sflag, size = 0x4, scoped, tag = 'scoped memory for tpu_custom_call.1']
    #allocation4 [shape = 's32[1]{0}', space=sflag, size = 0x4, scoped, tag = 'scoped memory for tpu_custom_call.1']
    #allocation5 [shape = 'u8[8192]{0}', space=vmem, size = 0x2000, scoped, tag = 'output window, operand 0, single buffered']
    %8 = vsyncpa [#allocation3], 0
    %9 = vsyncpa [#allocation4], 0
    // Predicated region
    $region2: #{tpu_custom_call.1} parent=1 // pred_check
      _
    $region3: #{tpu_custom_call.1} parent=1 // pred_check_branch
      %11 = sbr.rel (0) target = $region5
    $region4: #{tpu_custom_call.1} parent=1 // pred_region
      %s13 = ssub.s32 1280, 1280
      %14 = vsyncadd [#allocation3], %s13
      %s15 = sshll.u32 [#allocation2], 4
      %s16 = int_to_ptr.vmem [resolvable:$true] %s15
      %21 = dma.hbm_to_vmem [thread:$0]  %s0, 1280, %s16, [#allocation3], 256, 256, 16
    $region5: #{tpu_custom_call.1} parent=1 // pred_fallthru
      _
    // Predicated region
    $region6: #{tpu_custom_call.1} parent=1 // pred_check
      _
    $region7: #{tpu_custom_call.1} parent=1 // pred_check_branch
      %23 = sbr.rel (0) target = $region9
    $region8: #{tpu_custom_call.1} parent=1 // pred_region
      _
    $region9: #{tpu_custom_call.1} parent=1 // pred_fallthru
      _
    // Predicated region
    $region10: #{tpu_custom_call.1} parent=1 // pred_check
      _
    $region11: #{tpu_custom_call.1} parent=1 // pred_check_branch
      %25 = sbr.rel (0) target = $region13
    $region12: #{tpu_custom_call.1} parent=1 // pred_region
      _
    $region13: #{tpu_custom_call.1} parent=1 // pred_fallthru
      _
    // Predicated region
    $region14: #{tpu_custom_call.1} parent=1 // pred_check
      _
    $region15: #{tpu_custom_call.1} parent=1 // pred_check_branch
      %27 = sbr.rel (0) target = $region17
    $region16: #{tpu_custom_call.1} parent=1 // pred_region
      %28 = dma.done [#allocation3], 1280
    $region17: #{tpu_custom_call.1} parent=1 // pred_fallthru
      _
    %v30 = vld [vmem:[#allocation2] sm:$0xff]
    %v31 = vld [vmem:[#allocation2 + $0x8] sm:$0xff]
    %v32 = vld [vmem:[#allocation2 + $0x10] sm:$0xff]
    %v33 = vld [vmem:[#allocation2 + $0x18] sm:$0xff]
    %v34 = vld [vmem:[#allocation2 + $0x20] sm:$0xff]
    %v35 = vld [vmem:[#allocation2 + $0x28] sm:$0xff]
    %v36 = vld [vmem:[#allocation2 + $0x30] sm:$0xff]
    %v37 = vld [vmem:[#allocation2 + $0x38] sm:$0xff]
    %v38 = vld [vmem:[#allocation2 + $0x40] sm:$0x33]
    %v39 = vld [vmem:[#allocation2 + $0x48] sm:$0x33]
    %v40 = vld [vmem:[%s2] sm:$0x7]
    %v41 = vld [vmem:[%s1] sm:$0x3]
    %43 = vset.pattern.permute.xlu0 0
    %44 = vperm.xlu0 %43, %v40
    %v45 = vpop.permute.xlu0 %44
    %v57 = vunpack.c.l.b16 %v30
    %v58 = vunpack.c.h.b16 %v30
    %v59 = vunpack.c.l.b16 %v31
    %v60 = vunpack.c.h.b16 %v31
    %v61 = vunpack.c.l.b16 %v32
    %v62 = vunpack.c.h.b16 %v32
    %v63 = vunpack.c.l.b16 %v33
    %v64 = vunpack.c.h.b16 %v33
    %v65 = vunpack.c.l.b16 %v34
    %v66 = vunpack.c.h.b16 %v34
    %v67 = vunpack.c.l.b16 %v35
    %v68 = vunpack.c.h.b16 %v35
    %v69 = vunpack.c.l.b16 %v36
    %v70 = vunpack.c.h.b16 %v36
    %v71 = vunpack.c.l.b16 %v37
    %v72 = vunpack.c.h.b16 %v37
    %v73 = vunpack.c.l.b16 %v38
    %v74 = vunpack.c.h.b16 %v38
    %v75 = vunpack.c.l.b16 %v39
    %v76 = vunpack.c.h.b16 %v39
    %v77 = vpack.c.b16 %v61, %v57
    %v78 = vpack.c.b16 %v62, %v58
    %v79 = vpack.c.b16 %v63, %v59
    %v80 = vpack.c.b16 %v64, %v60
    %v81 = vpack.c.b16 %v69, %v65
    %v82 = vpack.c.b16 %v70, %v66
    %v83 = vpack.c.b16 %v71, %v67
    %v84 = vpack.c.b16 %v72, %v68
    %v85 = vpack.c.b16 %v73, %v73
    %v86 = vpack.c.b16 %v74, %v74
    %v87 = vpack.c.b16 %v75, %v75
    %v88 = vpack.c.b16 %v76, %v76
    %vm97 = vcmask 293888
    %v99 = vsel %vm97, %v41, 0
    %vm101 = vcmask 1041408
    %v103 = vsel %vm101, %v85, 0
    %v106 = vsel %vm101, %v86, 0
    %v109 = vsel %vm101, %v87, 0
    %v112 = vsel %vm101, %v88, 0
    %114 = vmatprep.subr.bf16.mxu0 %v78
    %115 = vmatpush1.bf16.msra.mxu0 %v77
    %116 = vmatprep.subr.bf16.mxu0 %v82
    %117 = vmatpush1.bf16.msra.mxu0 %v81
    %118 = vmatprep.subr.bf16.mxu0 %v106
    %119 = vmatpush1.bf16.msra.mxu0 %v103
    %120 = vmatprep.subr.bf16.mxu0 0
    %121 = vmatpush1.bf16.msra.mxu0 0
    %122 = vmatprep.subr.bf16.mxu0 0
    %123 = vmatpush1.bf16.msra.mxu0 0
    %124 = vmatprep.subr.bf16.mxu0 0
    %125 = vmatpush1.bf16.msra.mxu0 0
    %126 = vmatprep.subr.bf16.mxu0 0
    %127 = vmatpush1.bf16.msra.mxu0 0
    %128 = vmatprep.subr.bf16.mxu0 0
    %129 = vmatpush1.bf16.msra.mxu0 0
    %130 = vmatprep.subr.bf16.mxu0 0
    %131 = vmatpush1.bf16.msra.mxu0 0
    %132 = vmatprep.subr.bf16.mxu0 0
    %133 = vmatpush1.bf16.msra.mxu0 0
    %134 = vmatprep.subr.bf16.mxu0 0
    %135 = vmatpush1.bf16.msra.mxu0 0
    %136 = vmatprep.subr.bf16.mxu0 0
    %137 = vmatpush1.bf16.msra.mxu0 0
    %138 = vmatprep.subr.bf16.mxu0 0
    %139 = vmatpush1.bf16.msra.mxu0 0
    %140 = vmatprep.subr.bf16.mxu0 0
    %141 = vmatpush1.bf16.msra.mxu0 0
    %142 = vmatprep.subr.bf16.mxu0 0
    %143 = vmatpush1.bf16.msra.mxu0 0
    %144 = vmatprep.subr.bf16.mxu0 0
    %145 = vmatpush1.bf16.msra.mxu0 0
    %146 = vmatprep.mubr.bf16.mxu0 0
    %147 = vmatmul.mubr.bf16.gmra.mrb[0].mxu0 %v99
    %v148 = vpop.f32.mrb[0].mxu0
    %v149 = vadd.f32 %v45, %v148
    %v150 = vpop.f32.mrb[0].mxu0
    %v151 = vadd.f32 %v45, %v150
    %v152 = vpop.f32.mrb[0].mxu0
    %v153 = vpop.f32.mrb[0].mxu0
    %154 = vdwg.mxu0
    %155 = vmatprep.subr.bf16.mxu0 %v80
    %156 = vmatpush1.bf16.msra.mxu0 %v79
    %157 = vmatprep.subr.bf16.mxu0 %v84
    %158 = vmatpush1.bf16.msra.mxu0 %v83
    %159 = vmatprep.subr.bf16.mxu0 %v112
    %160 = vmatpush1.bf16.msra.mxu0 %v109
    %161 = vmatprep.subr.bf16.mxu0 0
    %162 = vmatpush1.bf16.msra.mxu0 0
    %163 = vmatprep.subr.bf16.mxu0 0
    %164 = vmatpush1.bf16.msra.mxu0 0
    %165 = vmatprep.subr.bf16.mxu0 0
    %166 = vmatpush1.bf16.msra.mxu0 0
    %167 = vmatprep.subr.bf16.mxu0 0
    %168 = vmatpush1.bf16.msra.mxu0 0
    %169 = vmatprep.subr.bf16.mxu0 0
    %170 = vmatpush1.bf16.msra.mxu0 0
    %171 = vmatprep.subr.bf16.mxu0 0
    %172 = vmatpush1.bf16.msra.mxu0 0
    %173 = vmatprep.subr.bf16.mxu0 0
    %174 = vmatpush1.bf16.msra.mxu0 0
    %175 = vmatprep.subr.bf16.mxu0 0
    %176 = vmatpush1.bf16.msra.mxu0 0
    %177 = vmatprep.subr.bf16.mxu0 0
    %178 = vmatpush1.bf16.msra.mxu0 0
    %179 = vmatprep.subr.bf16.mxu0 0
    %180 = vmatpush1.bf16.msra.mxu0 0
    %181 = vmatprep.subr.bf16.mxu0 0
    %182 = vmatpush1.bf16.msra.mxu0 0
    %183 = vmatprep.subr.bf16.mxu0 0
    %184 = vmatpush1.bf16.msra.mxu0 0
    %185 = vmatprep.subr.bf16.mxu0 0
    %186 = vmatpush1.bf16.msra.mxu0 0
    %187 = vmatprep.mubr.bf16.mxu0 0
    %188 = vmatmul.mubr.bf16.gmra.mrb[0].mxu0 %v99
    %v189 = vpop.f32.mrb[0].mxu0
    %v190 = vadd.f32 %v45, %v189
    %v191 = vpop.f32.mrb[0].mxu0
    %v192 = vadd.f32 %v45, %v191
    %v193 = vpop.f32.mrb[0].mxu0
    %v194 = vpop.f32.mrb[0].mxu0
    %195 = vdwg.mxu0
    %v200 = vcombine.low %v149, %v151
    %v201 = vcombine.low %v190, %v192
    %204 = vst [vmem:[#allocation5] sm:$0x77] %v200
    %205 = vst [vmem:[#allocation5 + $0x8] sm:$0x77] %v201
    // Predicated region
    $region18: #{tpu_custom_call.1} parent=1 // pred_check
      _
    $region19: #{tpu_custom_call.1} parent=1 // pred_check_branch
      %207 = sbr.rel (0) target = $region21
    $region20: #{tpu_custom_call.1} parent=1 // pred_region
      %s209 = ssub.s32 256, 256
      %210 = vsyncadd [#allocation4], %s209
      %s212 = sshll.u32 [#allocation5], 4
      %s213 = int_to_ptr.vmem [resolvable:$true] %s212
      %215 = dma.vmem_to_hbm [thread:$0]  %s213, 256, %s3, [#allocation4]
    $region21: #{tpu_custom_call.1} parent=1 // pred_fallthru
      _
    // Predicated region
    $region22: #{tpu_custom_call.1} parent=1 // pred_check
      _
    $region23: #{tpu_custom_call.1} parent=1 // pred_check_branch
      %217 = sbr.rel (0) target = $region25
    $region24: #{tpu_custom_call.1} parent=1 // pred_region
      %218 = dma.done [#allocation4], 256
    $region25: #{tpu_custom_call.1} parent=1 // pred_fallthru
      _
    %219 = vsyncpa [#allocation3], 1
    %220 = vsyncpa [#allocation4], 1

</llo_original>
